<compile_context>
chip_gen: v6e
topology: v6e:2x2x1
jax: 0.10.0
libtpu: 0.0.40
codegen_flags: <defaults>
</compile_context>

<pallas_src>
import functools

import jax
import jax.numpy as jnp
from jax.experimental import pallas as pl
from jax.experimental.pallas import tpu as pltpu


def _round_up(a, m):
    return (a + m - 1) // m * m


def _linear_kernel(x_ref, w_ref, b_ref, out_ref):
    # x_ref: (TM, Dp)  w_ref: (Dp, OUT)  b_ref: (1, OUT)  out_ref: (TM, OUT)
    y = jnp.dot(x_ref[...], w_ref[...], preferred_element_type=jnp.float32)
    out_ref[...] = (y + b_ref[...]).astype(out_ref.dtype)


@functools.partial(jax.jit, static_argnames=())
def linear_regression(x, w, b):
    """x: (N, D) float32, w: (1, D), b: (1,) -> (N, 1) float32."""
    N, D = x.shape
    OUT = w.shape[0]                      # == 1

    # ---- pad to TPU-friendly shapes (lane = 128, sublane = 8) -------------
    Dp = _round_up(D, 128)                # lane-aligned feature axis
    Np8 = _round_up(N, 8)                 # sublane-aligned row axis
    TM = min(Np8, 512)                    # row tile (multiple of 8)
    Np = _round_up(Np8, TM)

    x_p = jnp.zeros((Np, Dp), x.dtype).at[:N, :D].set(x)
    w_t = jnp.zeros((Dp, OUT), jnp.float32).at[:D, :].set(w.T)   # (Dp, OUT)
    b2 = b.reshape(1, OUT).astype(jnp.float32)                   # (1, OUT)

    y_p = pl.pallas_call(
        _linear_kernel,
        out_shape=jax.ShapeDtypeStruct((Np, OUT), jnp.float32),
        grid=(Np // TM,),
        in_specs=[
            pl.BlockSpec((TM, Dp), lambda i: (i, 0)),    # x row tile
            pl.BlockSpec((Dp, OUT), lambda i: (0, 0)),   # weights (resident)
            pl.BlockSpec((1, OUT), lambda i: (0, 0)),    # bias (resident)
        ],
        out_specs=pl.BlockSpec((TM, OUT), lambda i: (i, 0)),
        compiler_params=pltpu.CompilerParams(
            dimension_semantics=("parallel",),           # rows are independent
        ),
    )(x_p, w_t, b2)

    return y_p[:N, :]


def linear_regression_ref(x, w, b):
    """Pure-JAX reference mirroring torch.nn.Linear(num_input, 1)."""
    return x @ w.T + b


if __name__ == "__main__":
    N, D = 32, 8                          # small shapes consistent with the module

    key = jax.random.PRNGKey(0)
    k_x, k_w, k_b = jax.random.split(key, 3)
    x = jax.random.normal(k_x, (N, D), jnp.float32)

    # PyTorch-style init: U(-k, k), k = 1/sqrt(num_input)
    k = 1.0 / jnp.sqrt(D)
    w = jax.random.uniform(k_w, (1, D), jnp.float32, -k, k)
    b = jax.random.uniform(k_b, (1,), jnp.float32, -k, k)

    y = linear_regression(x, w, b)
    y = jax.block_until_ready(y)

    y_ref = linear_regression_ref(x, w, b)
    assert y.shape == (N, 1)
    assert jnp.allclose(y, y_ref, atol=1e-5, rtol=1e-5), (
        f"max abs err = {jnp.max(jnp.abs(y - y_ref))}")

    print("KERNEL_OK")
</pallas_src>

<mosaic_0001>
module attributes {stable_mosaic.version = 11 : i64} {
  func.func @_linear_kernel(%arg0: i32, %arg1: memref<32x128xf32, #tpu.memory_space<vmem>>, %arg2: memref<128x1xf32, #tpu.memory_space<vmem>>, %arg3: memref<1x1xf32, #tpu.memory_space<vmem>>, %arg4: memref<32x1xf32, #tpu.memory_space<vmem>>) attributes {dimension_semantics = [#tpu.dimension_semantics<parallel>], iteration_bounds = array<i64: 1>, scalar_prefetch = 0 : i64, scratch_operands = 0 : i64, tpu.core_type = #tpu.core_type<tc>, window_params = [{transform_indices = @transform_0, window_bounds = array<i64: 32, 128>}, {pipeline_mode = #tpu.pipeline_mode<synchronous>, transform_indices = @transform_1, window_bounds = array<i64: 128, 1>}, {pipeline_mode = #tpu.pipeline_mode<synchronous>, transform_indices = @transform_2, window_bounds = array<i64: 1, 1>}, {transform_indices = @transform_3, window_bounds = array<i64: 32, 1>}]} {
    %c0 = arith.constant 0 : index
    %c0_0 = arith.constant 0 : index
    %0 = vector.load %arg1[%c0, %c0_0] : memref<32x128xf32, #tpu.memory_space<vmem>>, vector<32x128xf32>
    %c0_1 = arith.constant 0 : index
    %c0_2 = arith.constant 0 : index
    %1 = vector.load %arg2[%c0_1, %c0_2] : memref<128x1xf32, #tpu.memory_space<vmem>>, vector<128x1xf32>
    %cst = arith.constant dense<0.000000e+00> : vector<32x1xf32>
    %2 = tpu.matmul %0, %1, %cst {dimension_numbers = #tpu.dot_dimension_numbers<[1], [0], [0], [1], [0, 0, 1, 1], [], []>} : vector<32x128xf32>, vector<128x1xf32>, vector<32x1xf32> -> vector<32x1xf32>
    %c0_3 = arith.constant 0 : index
    %c0_4 = arith.constant 0 : index
    %3 = vector.load %arg3[%c0_3, %c0_4] : memref<1x1xf32, #tpu.memory_space<vmem>>, vector<1x1xf32>
    %4 = vector.broadcast %3 : vector<1x1xf32> to vector<32x1xf32>
    %5 = arith.addf %2, %4 : vector<32x1xf32>
    %c0_5 = arith.constant 0 : index
    %c0_6 = arith.constant 0 : index
    %6 = vector.load %arg4[%c0_5, %c0_6] : memref<32x1xf32, #tpu.memory_space<vmem>>, vector<32x1xf32>
    tpu.vector_store %arg4[%c0_5, %c0_6], %5 {strides = array<i32>} : memref<32x1xf32, #tpu.memory_space<vmem>>, vector<32x1xf32>,
    return
  }
  func.func @transform_0(%arg0: i32) -> (i32, i32) {
    %c0_i32 = arith.constant 0 : i32
    %c0_i32_0 = arith.constant 0 : i32
    return %arg0, %c0_i32 : i32, i32
  }
  func.func @transform_1(%arg0: i32) -> (i32, i32) {
    %c0_i32 = arith.constant 0 : i32
    %c0_i32_0 = arith.constant 0 : i32
    %c0_i32_1 = arith.constant 0 : i32
    return %c0_i32, %c0_i32_0 : i32, i32
  }
  func.func @transform_2(%arg0: i32) -> (i32, i32) {
    %c0_i32 = arith.constant 0 : i32
    %c0_i32_0 = arith.constant 0 : i32
    %c0_i32_1 = arith.constant 0 : i32
    return %c0_i32, %c0_i32_0 : i32, i32
  }
  func.func @transform_3(%arg0: i32) -> (i32, i32) {
    %c0_i32 = arith.constant 0 : i32
    %c0_i32_0 = arith.constant 0 : i32
    return %arg0, %c0_i32 : i32, i32
  }
}

</mosaic_0001>

<llo_original>
// kernel: linear_regression.1
$region0: #{linear_regression.1}
  #allocation0 [shape = 'u32[]', space=smem, size = 0x4, offset = 0x4, fixed_abs, tag = 'smem constant byte address 0x4 - core index']
  #allocation1 [shape = 'u32[144,128]{1,0:T(1,128)}', space=vmem, size = 0x12000, scoped, tag = 'internal scratch']
  #allocation2 [shape = 'f32[1,1]{1,0:T(1,128)S(1)}', space=vmem, size = 0x200, scoped, tag = 'scoped memory for linear_regression.1']
  %s0 = inlined_call_operand.vmem [shape: f32[32,128], index: 0, kind: input, shape index: {}]
  %s1 = inlined_call_operand.vmem [shape: f32[128,1], index: 1, kind: input, shape index: {}]
  %s2 = inlined_call_operand.<no memory space> [shape: f32[1,1], index: 2, kind: input, shape index: {}]
  %s3 = inlined_call_operand.vmem [shape: f32[32,1], index: 3, kind: output, shape index: {}]
  %s4 = sld [smem:[#allocation0]]
  $region22: #{linear_regression.1} parent=0
    _
  %s6 = ssub.s32 1, %s4
  %s7 = scalar_select 0, %s6, %s4
  %v8 = vstv %s2
  %9 = vst [vmem:[#allocation2] sm:$0x1] %v8
  // Predicated region
  $region2: #{linear_regression.1} parent=0 // pred_check
    _
  $region3: #{linear_regression.1} parent=0 // pred_check_branch
    %11 = sbr.rel (0) target = $region5
  $region4: #{linear_regression.1} parent=0 // pred_region
    _
  $region5: #{linear_regression.1} parent=0 // pred_fallthru
    _
  // Predicated region
  $region6: #{linear_regression.1} parent=0 // pred_check
    _
  $region7: #{linear_regression.1} parent=0 // pred_check_branch
    %13 = sbr.rel (0) target = $region9
  $region8: #{linear_regression.1} parent=0 // pred_region
    _
  $region9: #{linear_regression.1} parent=0 // pred_fallthru
    _
  // Predicated region
  $region10: #{linear_regression.1} parent=0 // pred_check
    _
  $region11: #{linear_regression.1} parent=0 // pred_check_branch
    %15 = sbr.rel (0) target = $region13
  $region12: #{linear_regression.1} parent=0 // pred_region
    _
  $region13: #{linear_regression.1} parent=0 // pred_fallthru
    _
  %v16 = vld [vmem:[%s0] sm:$0xff]
  %v17 = vld [vmem:[%s0 + $0x8] sm:$0xff]
  %v18 = vld [vmem:[%s0 + $0x10] sm:$0xff]
  %v19 = vld [vmem:[%s0 + $0x18] sm:$0xff]
  %v20 = vld [vmem:[%s1] sm:$0xff]
  %v21 = vld [vmem:[%s1 + $0x8] sm:$0xff]
  %v22 = vld [vmem:[%s1 + $0x10] sm:$0xff]
  %v23 = vld [vmem:[%s1 + $0x18] sm:$0xff]
  %v24 = vld [vmem:[%s1 + $0x20] sm:$0xff]
  %v25 = vld [vmem:[%s1 + $0x28] sm:$0xff]
  %v26 = vld [vmem:[%s1 + $0x30] sm:$0xff]
  %v27 = vld [vmem:[%s1 + $0x38] sm:$0xff]
  %v28 = vld [vmem:[%s1 + $0x40] sm:$0xff]
  %v29 = vld [vmem:[%s1 + $0x48] sm:$0xff]
  %v30 = vld [vmem:[%s1 + $0x50] sm:$0xff]
  %v31 = vld [vmem:[%s1 + $0x58] sm:$0xff]
  %v32 = vld [vmem:[%s1 + $0x60] sm:$0xff]
  %v33 = vld [vmem:[%s1 + $0x68] sm:$0xff]
  %v34 = vld [vmem:[%s1 + $0x70] sm:$0xff]
  %v35 = vld [vmem:[%s1 + $0x78] sm:$0xff]
  %v36 = vld [vmem:[#allocation2] sm:$0x1]
  %v38 = vlaneseq
  %v39 = vshrl.u32 %v38, 7
  %v40 = vsub.s32 0, %v39
  %v41 = vrot.slane %v36, %v40
  %43 = vmatprep.subr.mxu0 0.0
  %44 = vmatpush1.msra.mxu0 %v35
  %45 = vmatprep.subr.mxu0 0.0
  %46 = vmatpush1.msra.mxu0 %v34
  %47 = vmatprep.subr.mxu0 0.0
  %48 = vmatpush1.msra.mxu0 %v33
  %49 = vmatprep.subr.mxu0 0.0
  %50 = vmatpush1.msra.mxu0 %v32
  %51 = vmatprep.subr.mxu0 0.0
  %52 = vmatpush1.msra.mxu0 %v31
  %53 = vmatprep.subr.mxu0 0.0
  %54 = vmatpush1.msra.mxu0 %v30
  %55 = vmatprep.subr.mxu0 0.0
  %56 = vmatpush1.msra.mxu0 %v29
  %57 = vmatprep.subr.mxu0 0.0
  %58 = vmatpush1.msra.mxu0 %v28
  %59 = vmatprep.subr.mxu0 0.0
  %60 = vmatpush1.msra.mxu0 %v27
  %61 = vmatprep.subr.mxu0 0.0
  %62 = vmatpush1.msra.mxu0 %v26
  %63 = vmatprep.subr.mxu0 0.0
  %64 = vmatpush1.msra.mxu0 %v25
  %65 = vmatprep.subr.mxu0 0.0
  %66 = vmatpush1.msra.mxu0 %v24
  %67 = vmatprep.subr.mxu0 0.0
  %68 = vmatpush1.msra.mxu0 %v23
  %69 = vmatprep.subr.mxu0 0.0
  %70 = vmatpush1.msra.mxu0 %v22
  %71 = vmatprep.subr.mxu0 0.0
  %72 = vmatpush1.msra.mxu0 %v21
  %73 = vmatprep.subr.mxu0 0.0
  %74 = vmatpush1.msra.mxu0 %v20
  %75 = vmatprep.subr.mxu0 0.0
  %76 = vmatpush2.msra.mxu0 0.0
  %77 = vmatprep.subr.mxu0 0.0
  %78 = vmatpush2.msra.mxu0 0.0
  %79 = vmatprep.subr.mxu0 0.0
  %80 = vmatpush2.msra.mxu0 0.0
  %81 = vmatprep.subr.mxu0 0.0
  %82 = vmatpush2.msra.mxu0 0.0
  %83 = vmatprep.subr.mxu0 0.0
  %84 = vmatpush2.msra.mxu0 0.0
  %85 = vmatprep.subr.mxu0 0.0
  %86 = vmatpush2.msra.mxu0 0.0
  %87 = vmatprep.subr.mxu0 0.0
  %88 = vmatpush2.msra.mxu0 0.0
  %89 = vmatprep.subr.mxu0 0.0
  %90 = vmatpush2.msra.mxu0 0.0
  %91 = vmatprep.subr.mxu0 0.0
  %92 = vmatpush2.msra.mxu0 0.0
  %93 = vmatprep.subr.mxu0 0.0
  %94 = vmatpush2.msra.mxu0 0.0
  %95 = vmatprep.subr.mxu0 0.0
  %96 = vmatpush2.msra.mxu0 0.0
  %97 = vmatprep.subr.mxu0 0.0
  %98 = vmatpush2.msra.mxu0 0.0
  %99 = vmatprep.subr.mxu0 0.0
  %100 = vmatpush2.msra.mxu0 0.0
  %101 = vmatprep.subr.mxu0 0.0
  %102 = vmatpush2.msra.mxu0 0.0
  %103 = vmatprep.subr.mxu0 0.0
  %104 = vmatpush2.msra.mxu0 0.0
  %105 = vmatprep.subr.mxu0 0.0
  %106 = vmatpush2.msra.mxu0 0.0
  %107 = vmatprep.mubr.f32.mxu0 0.0
  %108 = vmatmul.mubr.f32.gmra.mxu0 %v16
  %v109 = vpop.f32.mrf.mxu0
  %v110 = vadd.f32 %v41, %v109
  %v111 = vpop.f32.mrf.mxu0
  %112 = vmatprep.mubr.f32.mxu0 0.0
  %113 = vmatmul.mubr.f32.gmra.mxu0 %v17
  %v114 = vpop.f32.mrf.mxu0
  %v115 = vadd.f32 %v41, %v114
  %v116 = vpop.f32.mrf.mxu0
  %117 = vmatprep.mubr.f32.mxu0 0.0
  %118 = vmatmul.mubr.f32.gmra.mxu0 %v18
  %v119 = vpop.f32.mrf.mxu0
  %v120 = vadd.f32 %v41, %v119
  %v121 = vpop.f32.mrf.mxu0
  %122 = vmatprep.mubr.f32.mxu0 0.0
  %123 = vmatmul.mubr.f32.gmra.mxu0 %v19
  %v124 = vpop.f32.mrf.mxu0
  %v125 = vadd.f32 %v41, %v124
  %v126 = vpop.f32.mrf.mxu0
  %127 = vdwg.mxu0
  %vm128 = vcmask 7168
  %129 = vst.msk [vmem:[%s3] sm:$0xff] %vm128, %v110
  %130 = vst.msk [vmem:[%s3 + $0x8] sm:$0xff] %vm128, %v115
  %131 = vst.msk [vmem:[%s3 + $0x10] sm:$0xff] %vm128, %v120
  %132 = vst.msk [vmem:[%s3 + $0x18] sm:$0xff] %vm128, %v125
  // Predicated region
  $region14: #{linear_regression.1} parent=0 // pred_check
    _
  $region15: #{linear_regression.1} parent=0 // pred_check_branch
    %134 = sbr.rel (0) target = $region17
  $region16: #{linear_regression.1} parent=0 // pred_region
    _
  $region17: #{linear_regression.1} parent=0 // pred_fallthru
    _
  // Predicated region
  $region18: #{linear_regression.1} parent=0 // pred_check
    _
  $region19: #{linear_regression.1} parent=0 // pred_check_branch
    %136 = sbr.rel (0) target = $region21
  $region20: #{linear_regression.1} parent=0 // pred_region
    _
  $region21: #{linear_regression.1} parent=0 // pred_fallthru
    _

</llo_original>
